<compile_context>
chip_gen: v7x
topology: tpu7x:2x2x1
jax: 0.10.0
libtpu: 0.0.40
codegen_flags: <defaults>
</compile_context>

<pallas_src>
import jax
import jax.numpy as jnp
from jax.experimental import pallas as pl
from jax.experimental.pallas import tpu as pltpu
from typing import NamedTuple

H_NEURONS = 128
LANE = 128


def _round_up(x, m):
    return ((x + m - 1) // m) * m


class ActorParams(NamedTuple):
    w1: jax.Array     # [S, H]      bf16
    b1: jax.Array     # [1, H]      f32
    w2: jax.Array     # [H, A_pad]  bf16 (zero-padded fake-action columns)
    b2: jax.Array     # [1, A_pad]  f32  (-1e30 on fake-action lanes)
    action_size: int  # real A


def actor_kernel(x_ref, w1_ref, b1_ref, w2_ref, b2_ref, out_ref):
    a = out_ref.shape[-1]                      # real action count (static)

    # fc1: cast x to bf16 in-kernel (cheap VPU op, hidden under MXU/DMA), f32 accumulate.
    x_bf = x_ref[...].astype(jnp.bfloat16)
    h = jnp.dot(x_bf, w1_ref[...], preferred_element_type=jnp.float32)
    h = jnp.maximum(h + b1_ref[...], 0.0)

    # action_head: lane-dense (A padded to 128) bf16 matmul, f32 accumulate.
    logits = jnp.dot(h.astype(jnp.bfloat16), w2_ref[...],
                     preferred_element_type=jnp.float32)
    logits = logits + b2_ref[...]              # padded lanes carry -1e30 -> exp() == 0

    # Numerically stable softmax; padded lanes contribute exactly 0 to max/sum.
    m = jnp.max(logits, axis=-1, keepdims=True)
    e = jnp.exp(logits - m)
    denom = jnp.sum(e, axis=-1, keepdims=True)
    probs = e * pl.reciprocal(denom, approx=True)   # EUP slot; rows sum to 1 within ~1e-3

    # Store only the real action columns: 16x less HBM writeback than the padded f32 tile.
    out_ref[...] = probs[:, :a].astype(out_ref.dtype)


def prepare_actor_params(w1, b1, w2, b2):
    """One-time weight prep (lane pad, bf16 cast, bias reshape). Keep OUT of the forward."""
    S, H = w1.shape
    A = w2.shape[1]
    A_pad = _round_up(max(A, LANE), LANE)
    # Zero weight columns + -1e30 bias on fake actions: exp(logit - max) == 0 there,
    # so the in-kernel softmax over the padded lanes is exact. Bias stays f32.
    w2_p = jnp.pad(w2, ((0, 0), (0, A_pad - A)))
    b2_p = jnp.pad(b2, (0, A_pad - A), constant_values=-1e30)
    return ActorParams(
        w1=w1.astype(jnp.bfloat16),
        b1=b1.reshape(1, H).astype(jnp.float32),
        w2=w2_p.astype(jnp.bfloat16),
        b2=b2_p.reshape(1, A_pad).astype(jnp.float32),
        action_size=A,
    )


def actor_forward(x, params: ActorParams, *, block_b=1024):
    """x: [B, S] f32 -> action probabilities [B, A] f32."""
    B, S = x.shape
    H = params.w1.shape[1]
    A_pad = params.w2.shape[1]
    A = params.action_size

    # Batch tile: multiple of 8 sublanes; single grid step for small B, exact grid via pad.
    # (On v7x pick block_b so the number of tiles is an even >=2 split across the 2 TCs.)
    tb = _round_up(min(block_b, B), 8)
    B_pad = _round_up(B, tb)
    x_p = x if B_pad == B else jnp.pad(x, ((0, B_pad - B), (0, 0)))

    cost = pl.CostEstimate(
        flops=2 * B_pad * (S * H + H * A_pad),
        transcendentals=B_pad * A_pad,
        bytes_accessed=(x_p.size * 4 + B_pad * A * 4
                        + params.w1.size * 2 + params.w2.size * 2
                        + params.b1.size * 4 + params.b2.size * 4),
    )

    probs = pl.pallas_call(
        actor_kernel,
        out_shape=jax.ShapeDtypeStruct((B_pad, A), jnp.float32),
        grid=(B_pad // tb,),
        in_specs=[
            pl.BlockSpec((tb, S), lambda i: (i, 0)),       # x (f32): streamed per batch tile
            pl.BlockSpec((S, H), lambda i: (0, 0)),        # w1: fetched once, VMEM-resident
            pl.BlockSpec((1, H), lambda i: (0, 0)),        # b1
            pl.BlockSpec((H, A_pad), lambda i: (0, 0)),    # w2 (lane-padded)
            pl.BlockSpec((1, A_pad), lambda i: (0, 0)),    # b2 (lane-padded, -1e30)
        ],
        out_specs=pl.BlockSpec((tb, A), lambda i: (i, 0)), # narrow: only real actions stored
        compiler_params=pltpu.CompilerParams(
            dimension_semantics=("parallel",)),            # shard batch tiles over v7x's 2 TCs
        cost_estimate=cost,
    )(x_p, params.w1, params.b1, params.w2, params.b2)

    return probs if B_pad == B else probs[:B]


def init_params(key, state_size, action_size):
    """Deterministic init mimicking nn.Linear's U(-1/sqrt(fan_in), 1/sqrt(fan_in))."""
    k1, k2, k3, k4 = jax.random.split(key, 4)
    bound1 = 1.0 / jnp.sqrt(jnp.float32(state_size))
    bound2 = 1.0 / jnp.sqrt(jnp.float32(H_NEURONS))
    # Stored already transposed to [in, out] for the kernel.
    w1 = jax.random.uniform(k1, (state_size, H_NEURONS), jnp.float32, -bound1, bound1)
    b1 = jax.random.uniform(k2, (H_NEURONS,), jnp.float32, -bound1, bound1)
    w2 = jax.random.uniform(k3, (H_NEURONS, action_size), jnp.float32, -bound2, bound2)
    b2 = jax.random.uniform(k4, (action_size,), jnp.float32, -bound2, bound2)
    return w1, b1, w2, b2


def actor_reference_f32(x, w1, b1, w2, b2):
    h = jnp.maximum(x @ w1 + b1, 0.0)
    return jax.nn.softmax(h @ w2 + b2, axis=-1)


def actor_reference_bf16(x, w1, b1, w2, b2):
    # Same bf16-operand / f32-accumulate path the kernel uses (tight check).
    h = jnp.dot(x.astype(jnp.bfloat16), w1.astype(jnp.bfloat16),
                preferred_element_type=jnp.float32) + b1
    h = jnp.maximum(h, 0.0)
    logits = jnp.dot(h.astype(jnp.bfloat16), w2.astype(jnp.bfloat16),
                     preferred_element_type=jnp.float32) + b2
    return jax.nn.softmax(logits, axis=-1)


if __name__ == "__main__":
    state_size = 16    # traffic state features
    action_size = 8    # traffic-light phases
    batch = 512        # small; 2 tiles of 256 -> exercises the grid + even v7x TC split

    key = jax.random.PRNGKey(0)
    kx, kp = jax.random.split(key)
    x = jax.random.normal(kx, (batch, state_size), dtype=jnp.float32)
    w1, b1, w2, b2 = init_params(kp, state_size, action_size)
    params = prepare_actor_params(w1, b1, w2, b2)   # one-time prep, outside the forward path

    probs = actor_forward(x, params, block_b=256)
    probs = jax.block_until_ready(probs)

    assert probs.shape == (batch, action_size)
    # rows sum to 1 (approx reciprocal -> small slack)
    assert jnp.allclose(jnp.sum(probs, axis=-1), 1.0, atol=5e-3)
    # tight check vs a matched bf16-matmul reference; loose check vs the f32 spec
    assert jnp.allclose(probs, actor_reference_bf16(x, w1, b1, w2, b2), atol=5e-3, rtol=5e-3)
    assert jnp.allclose(probs, actor_reference_f32(x, w1, b1, w2, b2), atol=3e-2, rtol=3e-2)

    print("KERNEL_OK")
</pallas_src>

<mosaic_0001>
module attributes {stable_mosaic.version = 11 : i64} {
  func.func @actor_kernel(%arg0: i32, %arg1: memref<256x16xf32, #tpu.memory_space<vmem>>, %arg2: memref<16x128xbf16, #tpu.memory_space<vmem>>, %arg3: memref<1x128xf32, #tpu.memory_space<vmem>>, %arg4: memref<128x128xbf16, #tpu.memory_space<vmem>>, %arg5: memref<1x128xf32, #tpu.memory_space<vmem>>, %arg6: memref<256x8xf32, #tpu.memory_space<vmem>>) attributes {dimension_semantics = [#tpu.dimension_semantics<parallel>], iteration_bounds = array<i64: 2>, scalar_prefetch = 0 : i64, scratch_operands = 0 : i64, tpu.core_type = #tpu.core_type<tc>, window_params = [{transform_indices = @transform_0, window_bounds = array<i64: 256, 16>}, {pipeline_mode = #tpu.pipeline_mode<synchronous>, transform_indices = @transform_1, window_bounds = array<i64: 16, 128>}, {pipeline_mode = #tpu.pipeline_mode<synchronous>, transform_indices = @transform_2, window_bounds = array<i64: 1, 128>}, {pipeline_mode = #tpu.pipeline_mode<synchronous>, transform_indices = @transform_3, window_bounds = array<i64: 128, 128>}, {pipeline_mode = #tpu.pipeline_mode<synchronous>, transform_indices = @transform_4, window_bounds = array<i64: 1, 128>}, {transform_indices = @transform_5, window_bounds = array<i64: 256, 8>}]} {
    %c0 = arith.constant 0 : index
    %c0_0 = arith.constant 0 : index
    %0 = vector.load %arg1[%c0, %c0_0] : memref<256x16xf32, #tpu.memory_space<vmem>>, vector<256x16xf32>
    %1 = arith.truncf %0 : vector<256x16xf32> to vector<256x16xbf16>
    %c0_1 = arith.constant 0 : index
    %c0_2 = arith.constant 0 : index
    %2 = vector.load %arg2[%c0_1, %c0_2] : memref<16x128xbf16, #tpu.memory_space<vmem>>, vector<16x128xbf16>
    %cst = arith.constant dense<0.000000e+00> : vector<256x128xf32>
    %3 = tpu.matmul %1, %2, %cst {dimension_numbers = #tpu.dot_dimension_numbers<[1], [0], [0], [1], [0, 0, 1, 1], [], []>} : vector<256x16xbf16>, vector<16x128xbf16>, vector<256x128xf32> -> vector<256x128xf32>
    %c0_3 = arith.constant 0 : index
    %c0_4 = arith.constant 0 : index
    %4 = vector.load %arg3[%c0_3, %c0_4] : memref<1x128xf32, #tpu.memory_space<vmem>>, vector<1x128xf32>
    %5 = vector.broadcast %4 : vector<1x128xf32> to vector<256x128xf32>
    %6 = arith.addf %3, %5 : vector<256x128xf32>
    %cst_5 = arith.constant 0.000000e+00 : f32
    %7 = vector.broadcast %cst_5 : f32 to vector<256x128xf32>
    %8 = arith.maximumf %6, %7 : vector<256x128xf32>
    %9 = arith.truncf %8 : vector<256x128xf32> to vector<256x128xbf16>
    %c0_6 = arith.constant 0 : index
    %c0_7 = arith.constant 0 : index
    %10 = vector.load %arg4[%c0_6, %c0_7] : memref<128x128xbf16, #tpu.memory_space<vmem>>, vector<128x128xbf16>
    %cst_8 = arith.constant dense<0.000000e+00> : vector<256x128xf32>
    %11 = tpu.matmul %9, %10, %cst_8 {dimension_numbers = #tpu.dot_dimension_numbers<[1], [0], [0], [1], [0, 0, 1, 1], [], []>} : vector<256x128xbf16>, vector<128x128xbf16>, vector<256x128xf32> -> vector<256x128xf32>
    %c0_9 = arith.constant 0 : index
    %c0_10 = arith.constant 0 : index
    %12 = vector.load %arg5[%c0_9, %c0_10] : memref<1x128xf32, #tpu.memory_space<vmem>>, vector<1x128xf32>
    %13 = vector.broadcast %12 : vector<1x128xf32> to vector<256x128xf32>
    %14 = arith.addf %11, %13 : vector<256x128xf32>
    %cst_11 = arith.constant dense<0xFF800000> : vector<256xf32>
    %15 = vector.multi_reduction <maximumf>, %14, %cst_11 [1] : vector<256x128xf32> to vector<256xf32>
    %16 = vector.shape_cast %15 : vector<256xf32> to vector<256x1xf32>
    %17 = vector.broadcast %16 : vector<256x1xf32> to vector<256x128xf32>
    %18 = arith.subf %14, %17 : vector<256x128xf32>
    %19 = math.exp %18 : vector<256x128xf32>
    %cst_12 = arith.constant dense<0.000000e+00> : vector<256xf32>
    %20 = vector.multi_reduction <add>, %19, %cst_12 [1] : vector<256x128xf32> to vector<256xf32>
    %21 = vector.shape_cast %20 : vector<256xf32> to vector<256x1xf32>
    %22 = tpu.reciprocal %21 {approx = true} : vector<256x1xf32> -> vector<256x1xf32>
    %23 = vector.broadcast %22 : vector<256x1xf32> to vector<256x128xf32>
    %24 = arith.mulf %19, %23 : vector<256x128xf32>
    %25 = vector.extract_strided_slice %24 {offsets = [0, 0], sizes = [256, 8], strides = [1, 1]} : vector<256x128xf32> to vector<256x8xf32>
    %c0_13 = arith.constant 0 : index
    %c0_14 = arith.constant 0 : index
    %26 = vector.load %arg6[%c0_13, %c0_14] : memref<256x8xf32, #tpu.memory_space<vmem>>, vector<256x8xf32>
    tpu.vector_store %arg6[%c0_13, %c0_14], %25 {strides = array<i32>} : memref<256x8xf32, #tpu.memory_space<vmem>>, vector<256x8xf32>,
    return
  }
  func.func @transform_0(%arg0: i32) -> (i32, i32) {
    %c0_i32 = arith.constant 0 : i32
    %c0_i32_0 = arith.constant 0 : i32
    return %arg0, %c0_i32 : i32, i32
  }
  func.func @transform_1(%arg0: i32) -> (i32, i32) {
    %c0_i32 = arith.constant 0 : i32
    %c0_i32_0 = arith.constant 0 : i32
    %c0_i32_1 = arith.constant 0 : i32
    return %c0_i32, %c0_i32_0 : i32, i32
  }
  func.func @transform_2(%arg0: i32) -> (i32, i32) {
    %c0_i32 = arith.constant 0 : i32
    %c0_i32_0 = arith.constant 0 : i32
    %c0_i32_1 = arith.constant 0 : i32
    return %c0_i32, %c0_i32_0 : i32, i32
  }
  func.func @transform_3(%arg0: i32) -> (i32, i32) {
    %c0_i32 = arith.constant 0 : i32
    %c0_i32_0 = arith.constant 0 : i32
    %c0_i32_1 = arith.constant 0 : i32
    return %c0_i32, %c0_i32_0 : i32, i32
  }
  func.func @transform_4(%arg0: i32) -> (i32, i32) {
    %c0_i32 = arith.constant 0 : i32
    %c0_i32_0 = arith.constant 0 : i32
    %c0_i32_1 = arith.constant 0 : i32
    return %c0_i32, %c0_i32_0 : i32, i32
  }
  func.func @transform_5(%arg0: i32) -> (i32, i32) {
    %c0_i32 = arith.constant 0 : i32
    %c0_i32_0 = arith.constant 0 : i32
    return %arg0, %c0_i32 : i32, i32
  }
}

</mosaic_0001>

<llo_original>
// kernel: tpu_custom_call.1
$region0: #{tpu_custom_call.1}
  #allocation0 [shape = 'u32[]', space=smem, size = 0x4, offset = 0x4, fixed_abs, tag = 'smem constant byte address 0x4 - core index']
  #allocation1 [shape = 'u32[144,128]{1,0:T(1,128)}', space=vmem, size = 0x12000, scoped, tag = 'internal scratch']
  %s0 = inlined_call_operand.vmem [shape: f32[512,16], index: 0, kind: input, shape index: {}]
  %s1 = inlined_call_operand.vmem [shape: bf16[16,128], index: 1, kind: input, shape index: {}]
  %s2 = inlined_call_operand.vmem [shape: f32[1,128], index: 2, kind: input, shape index: {}]
  %s3 = inlined_call_operand.vmem [shape: bf16[128,128], index: 3, kind: input, shape index: {}]
  %s4 = inlined_call_operand.vmem [shape: f32[1,128], index: 4, kind: input, shape index: {}]
  %s5 = inlined_call_operand.vmem [shape: f32[512,8], index: 5, kind: output, shape index: {}]
  %s6 = sld [smem:[#allocation0]]
  $region53: #{tpu_custom_call.1} parent=0
    _
  %s8 = ssub.s32 1, %s6
  %s9 = scalar_select 0, %s8, %s6
  loop: start=0, step=1, limit=4
  $region2: #{tpu_custom_call.1} parent=0 // loop_pre_header
    _
  $region3: #{tpu_custom_call.1} parent=0 // loop_header
    %s11 = sphi 0, %s15
    %p12 = scmp.ge.s32.totalorder %s11, 4
    %s21 = sphi 0, %s23
    %s24 = sphi 0, %s21
    %s25 = sphi 0, %s24
    %s41 = sphi 0, %s25
    %s45 = sphi 0, %s45
    %s47 = sphi 0, %s45
    %s48 = sphi 0, %s47
    %s62 = sphi 0, %s48
    %s66 = sphi 0, %s66
    %s68 = sphi 0, %s66
    %s69 = sphi 0, %s68
    %s83 = sphi 0, %s69
    %s87 = sphi 0, %s87
    %s89 = sphi 0, %s87
    %s90 = sphi 0, %s89
    %s104 = sphi 0, %s90
    %s108 = sphi 0, %s108
    %s110 = sphi 0, %s108
    %s111 = sphi 0, %s110
    %s125 = sphi 0, %s111
    %s131 = sphi 0, %s133
    %s134 = sphi 0, %s131
    %s135 = sphi 0, %s134
    %s151 = sphi 0, %s135
  $region4: #{tpu_custom_call.1} parent=0 // loop_header_branch
    %14 = sbr.rel (%p12) target = $region8
  $region5: #{tpu_custom_call.1} parent=0 // loop_body
    %s16 = ssub.s32 %s11, 1
    %s17 = ssub.s32 %s11, 2
    %s18 = sadd.s32 %s11, 1
    %s19 = ssub.s32 %s11, %s18
    %p20 = scmp.eq.s32.totalorder %s19, 0
    %s22 = sadd.s32 %s21, 1
    %s23 = scalar_select %p20, %s21, %s22
    %p26 = pneg %p20
    %p27 = scmp.eq.s32.totalorder %s11, 1
    %p28 = por %p26, %p27
    %p29 = scmp.ne.s32.totalorder %s21, %s24
    %p30 = scmp.eq.s32.totalorder %s11, 0
    %p31 = por %p29, %p30
    %p32 = scmp.ne.s32.totalorder %s21, %s24
    %p33 = scmp.eq.s32.totalorder %s16, 1
    %p34 = por %p32, %p33
    %p35 = scmp.ne.s32.totalorder %s24, %s25
    %p36 = scmp.eq.s32.totalorder %s16, 0
    %p37 = por %p35, %p36
    %p38 = scmp.ne.s32.totalorder %s24, %s25
    %p39 = scmp.eq.s32.totalorder %s17, 1
    %p40 = por %p38, %p39
    %p42 = scmp.ne.s32.totalorder %s25, %s41
    %p43 = scmp.eq.s32.totalorder %s17, 0
    %p44 = por %p42, %p43
    %s46 = sadd.s32 %s45, 1
    %p49 = scmp.eq.s32.totalorder %s11, 1
    %p50 = scmp.ne.s32.totalorder %s45, %s47
    %p51 = scmp.eq.s32.totalorder %s11, 0
    %p52 = por %p50, %p51
    %p53 = scmp.ne.s32.totalorder %s45, %s47
    %p54 = scmp.eq.s32.totalorder %s16, 1
    %p55 = por %p53, %p54
    %p56 = scmp.ne.s32.totalorder %s47, %s48
    %p57 = scmp.eq.s32.totalorder %s16, 0
    %p58 = por %p56, %p57
    %p59 = scmp.ne.s32.totalorder %s47, %s48
    %p60 = scmp.eq.s32.totalorder %s17, 1
    %p61 = por %p59, %p60
    %p63 = scmp.ne.s32.totalorder %s48, %s62
    %p64 = scmp.eq.s32.totalorder %s17, 0
    %p65 = por %p63, %p64
    %s67 = sadd.s32 %s66, 1
    %p70 = scmp.eq.s32.totalorder %s11, 1
    %p71 = scmp.ne.s32.totalorder %s66, %s68
    %p72 = scmp.eq.s32.totalorder %s11, 0
    %p73 = por %p71, %p72
    %p74 = scmp.ne.s32.totalorder %s66, %s68
    %p75 = scmp.eq.s32.totalorder %s16, 1
    %p76 = por %p74, %p75
    %p77 = scmp.ne.s32.totalorder %s68, %s69
    %p78 = scmp.eq.s32.totalorder %s16, 0
    %p79 = por %p77, %p78
    %p80 = scmp.ne.s32.totalorder %s68, %s69
    %p81 = scmp.eq.s32.totalorder %s17, 1
    %p82 = por %p80, %p81
    %p84 = scmp.ne.s32.totalorder %s69, %s83
    %p85 = scmp.eq.s32.totalorder %s17, 0
    %p86 = por %p84, %p85
    %s88 = sadd.s32 %s87, 1
    %p91 = scmp.eq.s32.totalorder %s11, 1
    %p92 = scmp.ne.s32.totalorder %s87, %s89
    %p93 = scmp.eq.s32.totalorder %s11, 0
    %p94 = por %p92, %p93
    %p95 = scmp.ne.s32.totalorder %s87, %s89
    %p96 = scmp.eq.s32.totalorder %s16, 1
    %p97 = por %p95, %p96
    %p98 = scmp.ne.s32.totalorder %s89, %s90
    %p99 = scmp.eq.s32.totalorder %s16, 0
    %p100 = por %p98, %p99
    %p101 = scmp.ne.s32.totalorder %s89, %s90
    %p102 = scmp.eq.s32.totalorder %s17, 1
    %p103 = por %p101, %p102
    %p105 = scmp.ne.s32.totalorder %s90, %s104
    %p106 = scmp.eq.s32.totalorder %s17, 0
    %p107 = por %p105, %p106
    %s109 = sadd.s32 %s108, 1
    %p112 = scmp.eq.s32.totalorder %s11, 1
    %p113 = scmp.ne.s32.totalorder %s108, %s110
    %p114 = scmp.eq.s32.totalorder %s11, 0
    %p115 = por %p113, %p114
    %p116 = scmp.ne.s32.totalorder %s108, %s110
    %p117 = scmp.eq.s32.totalorder %s16, 1
    %p118 = por %p116, %p117
    %p119 = scmp.ne.s32.totalorder %s110, %s111
    %p120 = scmp.eq.s32.totalorder %s16, 0
    %p121 = por %p119, %p120
    %p122 = scmp.ne.s32.totalorder %s110, %s111
    %p123 = scmp.eq.s32.totalorder %s17, 1
    %p124 = por %p122, %p123
    %p126 = scmp.ne.s32.totalorder %s111, %s125
    %p127 = scmp.eq.s32.totalorder %s17, 0
    %p128 = por %p126, %p127
    %s129 = ssub.s32 %s11, %s18
    %p130 = scmp.eq.s32.totalorder %s129, 0
    %s132 = sadd.s32 %s131, 1
    %s133 = scalar_select %p130, %s131, %s132
    %p136 = pneg %p130
    %p137 = scmp.eq.s32.totalorder %s11, 1
    %p138 = por %p136, %p137
    %p139 = scmp.ne.s32.totalorder %s131, %s134
    %p140 = scmp.eq.s32.totalorder %s11, 0
    %p141 = por %p139, %p140
    %p142 = scmp.ne.s32.totalorder %s131, %s134
    %p143 = scmp.eq.s32.totalorder %s16, 1
    %p144 = por %p142, %p143
    %p145 = scmp.ne.s32.totalorder %s134, %s135
    %p146 = scmp.eq.s32.totalorder %s16, 0
    %p147 = por %p145, %p146
    %p148 = scmp.ne.s32.totalorder %s134, %s135
    %p149 = scmp.eq.s32.totalorder %s17, 1
    %p150 = por %p148, %p149
    %p152 = scmp.ne.s32.totalorder %s135, %s151
    %p153 = scmp.eq.s32.totalorder %s17, 0
    %p154 = por %p152, %p153
    %p155 = scmp.le.s32.totalorder 1, %s11
    %p156 = scmp.lt.s32.totalorder %s11, 3
    %p157 = pnand %p155, %p156
    %p158 = pneg %p157
    // Predicated region
    $region9: #{tpu_custom_call.1} parent=5 // pred_check
      _
    $region10: #{tpu_custom_call.1} parent=5 // pred_check_branch
      %160 = sbr.rel (%p157) target = $region12
    $region11: #{tpu_custom_call.1} parent=5 // pred_region
      %s161 = ssub.s32 %s11, 1
      // Predicated region
      $region13: #{tpu_custom_call.1} parent=11 // pred_check
        %p162 = pneg %p58
      $region14: #{tpu_custom_call.1} parent=11 // pred_check_branch
        %164 = sbr.rel (%p162) target = $region16
      $region15: #{tpu_custom_call.1} parent=11 // pred_region
        _
      $region16: #{tpu_custom_call.1} parent=11 // pred_fallthru
        _
      // Predicated region
      $region17: #{tpu_custom_call.1} parent=11 // pred_check
        %p165 = pneg %p79
      $region18: #{tpu_custom_call.1} parent=11 // pred_check_branch
        %167 = sbr.rel (%p165) target = $region20
      $region19: #{tpu_custom_call.1} parent=11 // pred_region
        _
      $region20: #{tpu_custom_call.1} parent=11 // pred_fallthru
        _
      // Predicated region
      $region21: #{tpu_custom_call.1} parent=11 // pred_check
        %p168 = pneg %p100
      $region22: #{tpu_custom_call.1} parent=11 // pred_check_branch
        %170 = sbr.rel (%p168) target = $region24
      $region23: #{tpu_custom_call.1} parent=11 // pred_region
        _
      $region24: #{tpu_custom_call.1} parent=11 // pred_fallthru
        _
      // Predicated region
      $region25: #{tpu_custom_call.1} parent=11 // pred_check
        %p171 = pneg %p121
      $region26: #{tpu_custom_call.1} parent=11 // pred_check_branch
        %173 = sbr.rel (%p171) target = $region28
      $region27: #{tpu_custom_call.1} parent=11 // pred_region
        _
      $region28: #{tpu_custom_call.1} parent=11 // pred_fallthru
        _
    $region12: #{tpu_custom_call.1} parent=5 // pred_fallthru
      _
    %p174 = scmp.lt.s32.totalorder %s11, 2
    // Predicated region
    $region29: #{tpu_custom_call.1} parent=5 // pred_check
      %p175 = pneg %p174
    $region30: #{tpu_custom_call.1} parent=5 // pred_check_branch
      %177 = sbr.rel (%p175) target = $region32
    $region31: #{tpu_custom_call.1} parent=5 // pred_region
      // Predicated region
      $region33: #{tpu_custom_call.1} parent=31 // pred_check
        %p178 = pneg %p31
      $region34: #{tpu_custom_call.1} parent=31 // pred_check_branch
        %180 = sbr.rel (%p178) target = $region36
      $region35: #{tpu_custom_call.1} parent=31 // pred_region
        %s181 = smul.u32 32, %s11
        %p182 = scmp.lt.s32.totalorder %s181, 63
        %s183 = scalar_select %p182, %s181, 63
        %s184 = smul.addr %s183, 8
        %s185 = scalar_lea.vmem %s0, %s184
        %s186 = smul.u32 32, %s11
      $region36: #{tpu_custom_call.1} parent=31 // pred_fallthru
        _
    $region32: #{tpu_custom_call.1} parent=5 // pred_fallthru
      _
    %p187 = scmp.le.s32.totalorder 1, %s11
    %p188 = scmp.lt.s32.totalorder %s11, 3
    %p189 = pnand %p187, %p188
    %p190 = pneg %p189
    // Predicated region
    $region37: #{tpu_custom_call.1} parent=5 // pred_check
      _
    $region38: #{tpu_custom_call.1} parent=5 // pred_check_branch
      %192 = sbr.rel (%p189) target = $region40
    $region39: #{tpu_custom_call.1} parent=5 // pred_region
      %s193 = ssub.s32 %s11, 1
      %s194 = smul.u32 32, %s16
      %p195 = scmp.lt.s32.totalorder %s194, 63
      %s196 = scalar_select %p195, %s194, 63
      %s197 = smul.addr %s196, 8
      %s198 = scalar_lea.vmem %s0, %s197
      %p199 = pneg %p37
      %p200 = pneg %p34
      %p201 = pneg %p58
      %p202 = pneg %p55
      %p203 = pneg %p79
      %p204 = pneg %p76
      %p205 = pneg %p100
      %p206 = pneg %p97
      %p207 = pneg %p121
      %p208 = pneg %p118
      %p209 = pneg %p147
      %p210 = pneg %p144
      %s211 = smul.u32 32, %s16
      %p212 = scmp.lt.s32.totalorder %s211, 63
      %s213 = scalar_select %p212, %s211, 63
      %s214 = smul.addr %s213, 8
      %s215 = scalar_lea.vmem %s5, %s214
      %s216 = smul.u32 32, %s16
      %p217 = scmp.lt.s32.totalorder %s216, 63
      %s218 = scalar_select %p217, %s216, 63
      %s219 = smul.addr %s218, 8
      %s220 = scalar_lea.vmem %s0, %s219
      %s221 = smul.u32 32, %s16
      %s222 = smul.u32 32, %s16
      %p223 = scmp.lt.s32.totalorder %s222, 63
      %s224 = scalar_select %p223, %s222, 63
      %s225 = smul.addr %s224, 8
      %s226 = scalar_lea.vmem %s5, %s225
      %s227 = smul.u32 32, %s16
      %v229 = vld [vmem:[%s220] sm:$0xff]
      %v230 = vld [vmem:[%s220 + $0x8] sm:$0xff]
      %v231 = vld [vmem:[%s220 + $0x10] sm:$0xff]
      %v232 = vld [vmem:[%s220 + $0x18] sm:$0xff]
      %v233 = vld [vmem:[%s220 + $0x20] sm:$0xff]
      %v234 = vld [vmem:[%s220 + $0x28] sm:$0xff]
      %v235 = vld [vmem:[%s220 + $0x30] sm:$0xff]
      %v236 = vld [vmem:[%s220 + $0x38] sm:$0xff]
      %v237 = vld [vmem:[%s220 + $0x40] sm:$0xff]
      %v238 = vld [vmem:[%s220 + $0x48] sm:$0xff]
      %v239 = vld [vmem:[%s220 + $0x50] sm:$0xff]
      %v240 = vld [vmem:[%s220 + $0x58] sm:$0xff]
      %v241 = vld [vmem:[%s220 + $0x60] sm:$0xff]
      %v242 = vld [vmem:[%s220 + $0x68] sm:$0xff]
      %v243 = vld [vmem:[%s220 + $0x70] sm:$0xff]
      %v244 = vld [vmem:[%s220 + $0x78] sm:$0xff]
      %v245 = vld [vmem:[%s220 + $0x80] sm:$0xff]
      %v246 = vld [vmem:[%s220 + $0x88] sm:$0xff]
      %v247 = vld [vmem:[%s220 + $0x90] sm:$0xff]
      %v248 = vld [vmem:[%s220 + $0x98] sm:$0xff]
      %v249 = vld [vmem:[%s220 + $0xa0] sm:$0xff]
      %v250 = vld [vmem:[%s220 + $0xa8] sm:$0xff]
      %v251 = vld [vmem:[%s220 + $0xb0] sm:$0xff]
      %v252 = vld [vmem:[%s220 + $0xb8] sm:$0xff]
      %v253 = vld [vmem:[%s220 + $0xc0] sm:$0xff]
      %v254 = vld [vmem:[%s220 + $0xc8] sm:$0xff]
      %v255 = vld [vmem:[%s220 + $0xd0] sm:$0xff]
      %v256 = vld [vmem:[%s220 + $0xd8] sm:$0xff]
      %v257 = vld [vmem:[%s220 + $0xe0] sm:$0xff]
      %v258 = vld [vmem:[%s220 + $0xe8] sm:$0xff]
      %v259 = vld [vmem:[%s220 + $0xf0] sm:$0xff]
      %v260 = vld [vmem:[%s220 + $0xf8] sm:$0xff]
      %v261 = vpack.c.bf16 %v230, %v229
      %v262 = vpack.c.bf16 %v232, %v231
      %v263 = vpack.c.bf16 %v234, %v233
      %v264 = vpack.c.bf16 %v236, %v235
      %v265 = vpack.c.bf16 %v238, %v237
      %v266 = vpack.c.bf16 %v240, %v239
      %v267 = vpack.c.bf16 %v242, %v241
      %v268 = vpack.c.bf16 %v244, %v243
      %v269 = vpack.c.bf16 %v246, %v245
      %v270 = vpack.c.bf16 %v248, %v247
      %v271 = vpack.c.bf16 %v250, %v249
      %v272 = vpack.c.bf16 %v252, %v251
      %v273 = vpack.c.bf16 %v254, %v253
      %v274 = vpack.c.bf16 %v256, %v255
      %v275 = vpack.c.bf16 %v258, %v257
      %v276 = vpack.c.bf16 %v260, %v259
      %v277 = vld [vmem:[%s1] sm:$0xf]
      %v278 = vld [vmem:[%s1 + $0x4] sm:$0xf]
      %v279 = vld [vmem:[%s2] sm:$0x1]
      %v281 = vlaneseq
      %v282 = vshrl.u32 %v281, 7
      %v283 = vsub.s32 0, %v282
      %v284 = vrot.slane %v279, %v283
      %v288 = vunpack.c.l.b16 %v277
      %v289 = vunpack.c.l.b16 %v278
      %v290 = vpack.c.b16 %v289, %v288
      %vm292 = vcmask 130048
      %v294 = vsel %vm292, %v261, 0
      %v297 = vsel %vm292, %v262, 0
      %v300 = vsel %vm292, %v263, 0
      %v303 = vsel %vm292, %v264, 0
      %v306 = vsel %vm292, %v265, 0
      %v309 = vsel %vm292, %v266, 0
      %v312 = vsel %vm292, %v267, 0
      %v315 = vsel %vm292, %v268, 0
      %v318 = vsel %vm292, %v269, 0
      %v321 = vsel %vm292, %v270, 0
      %v324 = vsel %vm292, %v271, 0
      %v327 = vsel %vm292, %v272, 0
      %v330 = vsel %vm292, %v273, 0
      %v333 = vsel %vm292, %v274, 0
      %v336 = vsel %vm292, %v275, 0
      %v339 = vsel %vm292, %v276, 0
      %341 = vmatprep.subr.bf16.mxu0 0
      %342 = vmatpush1.bf16.msra.mxu0 %v290
      %343 = vmatprep.subr.bf16.mxu0 0
      %344 = vmatpush1.bf16.msra.mxu0 0
      %345 = vmatprep.subr.bf16.mxu0 0
      %346 = vmatpush1.bf16.msra.mxu0 0
      %347 = vmatprep.subr.bf16.mxu0 0
      %348 = vmatpush1.bf16.msra.mxu0 0
      %349 = vmatprep.subr.bf16.mxu0 0
      %350 = vmatpush1.bf16.msra.mxu0 0
      %351 = vmatprep.subr.bf16.mxu0 0
      %352 = vmatpush1.bf16.msra.mxu0 0
      %353 = vmatprep.subr.bf16.mxu0 0
      %354 = vmatpush1.bf16.msra.mxu0 0
      %355 = vmatprep.subr.bf16.mxu0 0
      %356 = vmatpush1.bf16.msra.mxu0 0
      %357 = vmatprep.subr.bf16.mxu0 0
      %358 = vmatpush1.bf16.msra.mxu0 0
      %359 = vmatprep.subr.bf16.mxu0 0
      %360 = vmatpush1.bf16.msra.mxu0 0
      %361 = vmatprep.subr.bf16.mxu0 0
      %362 = vmatpush1.bf16.msra.mxu0 0
      %363 = vmatprep.subr.bf16.mxu0 0
      %364 = vmatpush1.bf16.msra.mxu0 0
      %365 = vmatprep.subr.bf16.mxu0 0
      %366 = vmatpush1.bf16.msra.mxu0 0
      %367 = vmatprep.subr.bf16.mxu0 0
      %368 = vmatpush1.bf16.msra.mxu0 0
      %369 = vmatprep.subr.bf16.mxu0 0
      %370 = vmatpush1.bf16.msra.mxu0 0
      %371 = vmatprep.subr.bf16.mxu0 0
      %372 = vmatpush1.bf16.msra.mxu0 0
      %373 = vmatprep.mubr.bf16.mxu0 0
      %374 = vmatmul.mubr.bf16.gmra.mrb[0].mxu0 %v294
      %v375 = vpop.f32.mrb[0].mxu0
      %v376 = vadd.f32 %v284, %v375
      %v377 = vpop.f32.mrb[0].mxu0
      %v378 = vpop.f32.mrb[0].mxu0
      %v379 = vadd.f32 %v284, %v378
      %v380 = vpop.f32.mrb[0].mxu0
      %381 = vmatprep.mubr.bf16.mxu0 0
      %382 = vmatmul.mubr.bf16.gmra.mrb[0].mxu0 %v297
      %v383 = vpop.f32.mrb[0].mxu0
      %v384 = vadd.f32 %v284, %v383
      %v385 = vpop.f32.mrb[0].mxu0
      %v386 = vpop.f32.mrb[0].mxu0
      %v387 = vadd.f32 %v284, %v386
      %v388 = vpop.f32.mrb[0].mxu0
      %389 = vmatprep.mubr.bf16.mxu0 0
      %390 = vmatmul.mubr.bf16.gmra.mrb[0].mxu0 %v300
      %v391 = vpop.f32.mrb[0].mxu0
      %v392 = vadd.f32 %v284, %v391
      %v393 = vpop.f32.mrb[0].mxu0
      %v394 = vpop.f32.mrb[0].mxu0
      %v395 = vadd.f32 %v284, %v394
      %v396 = vpop.f32.mrb[0].mxu0
      %397 = vmatprep.mubr.bf16.mxu0 0
      %398 = vmatmul.mubr.bf16.gmra.mrb[0].mxu0 %v303
      %v399 = vpop.f32.mrb[0].mxu0
      %v400 = vadd.f32 %v284, %v399
      %v401 = vpop.f32.mrb[0].mxu0
      %v402 = vpop.f32.mrb[0].mxu0
      %v403 = vadd.f32 %v284, %v402
      %v404 = vpop.f32.mrb[0].mxu0
      %405 = vmatprep.mubr.bf16.mxu0 0
      %406 = vmatmul.mubr.bf16.gmra.mrb[0].mxu0 %v306
      %v407 = vpop.f32.mrb[0].mxu0
      %v408 = vadd.f32 %v284, %v407
      %v409 = vpop.f32.mrb[0].mxu0
      %v410 = vpop.f32.mrb[0].mxu0
      %v411 = vadd.f32 %v284, %v410
      %v412 = vpop.f32.mrb[0].mxu0
      %413 = vmatprep.mubr.bf16.mxu0 0
      %414 = vmatmul.mubr.bf16.gmra.mrb[0].mxu0 %v309
      %v415 = vpop.f32.mrb[0].mxu0
      %v416 = vadd.f32 %v284, %v415
      %v417 = vpop.f32.mrb[0].mxu0
      %v418 = vpop.f32.mrb[0].mxu0
      %v419 = vadd.f32 %v284, %v418
      %v420 = vpop.f32.mrb[0].mxu0
      %421 = vmatprep.mubr.bf16.mxu0 0
      %422 = vmatmul.mubr.bf16.gmra.mrb[0].mxu0 %v312
      %v423 = vpop.f32.mrb[0].mxu0
      %v424 = vadd.f32 %v284, %v423
      %v425 = vpop.f32.mrb[0].mxu0
      %v426 = vpop.f32.mrb[0].mxu0
      %v427 = vadd.f32 %v284, %v426
      %v428 = vpop.f32.mrb[0].mxu0
      %429 = vmatprep.mubr.bf16.mxu0 0
      %430 = vmatmul.mubr.bf16.gmra.mrb[0].mxu0 %v315
      %v431 = vpop.f32.mrb[0].mxu0
      %v432 = vadd.f32 %v284, %v431
      %v433 = vpop.f32.mrb[0].mxu0
      %v434 = vpop.f32.mrb[0].mxu0
      %v435 = vadd.f32 %v284, %v434
      %v436 = vpop.f32.mrb[0].mxu0
      %437 = vmatprep.mubr.bf16.mxu0 0
      %438 = vmatmul.mubr.bf16.gmra.mrb[0].mxu0 %v318
      %v439 = vpop.f32.mrb[0].mxu0
      %v440 = vadd.f32 %v284, %v439
      %v441 = vpop.f32.mrb[0].mxu0
      %v442 = vpop.f32.mrb[0].mxu0
      %v443 = vadd.f32 %v284, %v442
      %v444 = vpop.f32.mrb[0].mxu0
      %445 = vmatprep.mubr.bf16.mxu0 0
      %446 = vmatmul.mubr.bf16.gmra.mrb[0].mxu0 %v321
      %v447 = vpop.f32.mrb[0].mxu0
      %v448 = vadd.f32 %v284, %v447
      %v449 = vpop.f32.mrb[0].mxu0
      %v450 = vpop.f32.mrb[0].mxu0
      %v451 = vadd.f32 %v284, %v450
      %v452 = vpop.f32.mrb[0].mxu0
      %453 = vmatprep.mubr.bf16.mxu0 0
      %454 = vmatmul.mubr.bf16.gmra.mrb[0].mxu0 %v324
      %v455 = vpop.f32.mrb[0].mxu0
      %v456 = vadd.f32 %v284, %v455
      %v457 = vpop.f32.mrb[0].mxu0
      %v458 = vpop.f32.mrb[0].mxu0
      %v459 = vadd.f32 %v284, %v458
      %v460 = vpop.f32.mrb[0].mxu0
      %461 = vmatprep.mubr.bf16.mxu0 0
      %462 = vmatmul.mubr.bf16.gmra.mrb[0].mxu0 %v327
      %v463 = vpop.f32.mrb[0].mxu0
      %v464 = vadd.f32 %v284, %v463
      %v465 = vpop.f32.mrb[0].mxu0
      %v466 = vpop.f32.mrb[0].mxu0
      %v467 = vadd.f32 %v284, %v466
      %v468 = vpop.f32.mrb[0].mxu0
      %469 = vmatprep.mubr.bf16.mxu0 0
      %470 = vmatmul.mubr.bf16.gmra.mrb[0].mxu0 %v330
      %v471 = vpop.f32.mrb[0].mxu0
      %v472 = vadd.f32 %v284, %v471
      %v473 = vpop.f32.mrb[0].mxu0
      %v474 = vpop.f32.mrb[0].mxu0
      %v475 = vadd.f32 %v284, %v474
      %v476 = vpop.f32.mrb[0].mxu0
      %477 = vmatprep.mubr.bf16.mxu0 0
      %478 = vmatmul.mubr.bf16.gmra.mrb[0].mxu0 %v333
      %v479 = vpop.f32.mrb[0].mxu0
      %v480 = vadd.f32 %v284, %v479
      %v481 = vpop.f32.mrb[0].mxu0
      %v482 = vpop.f32.mrb[0].mxu0
      %v483 = vadd.f32 %v284, %v482
      %v484 = vpop.f32.mrb[0].mxu0
      %485 = vmatprep.mubr.bf16.mxu0 0
      %486 = vmatmul.mubr.bf16.gmra.mrb[0].mxu0 %v336
      %v487 = vpop.f32.mrb[0].mxu0
      %v488 = vadd.f32 %v284, %v487
      %v489 = vpop.f32.mrb[0].mxu0
      %v490 = vpop.f32.mrb[0].mxu0
      %v491 = vadd.f32 %v284, %v490
      %v492 = vpop.f32.mrb[0].mxu0
      %493 = vmatprep.mubr.bf16.mxu0 0
      %494 = vmatmul.mubr.bf16.gmra.mrb[0].mxu0 %v339
      %v495 = vpop.f32.mrb[0].mxu0
      %v496 = vadd.f32 %v284, %v495
      %v497 = vpop.f32.mrb[0].mxu0
      %v498 = vpop.f32.mrb[0].mxu0
      %v499 = vadd.f32 %v284, %v498
      %v500 = vpop.f32.mrb[0].mxu0
      %501 = vdwg.mxu0
      %v502 = vmax.f32 %v376, 0.0
      %v503 = vmax.f32 %v379, 0.0
      %v504 = vmax.f32 %v384, 0.0
      %v505 = vmax.f32 %v387, 0.0
      %v506 = vmax.f32 %v392, 0.0
      %v507 = vmax.f32 %v395, 0.0
      %v508 = vmax.f32 %v400, 0.0
      %v509 = vmax.f32 %v403, 0.0
      %v510 = vmax.f32 %v408, 0.0
      %v511 = vmax.f32 %v411, 0.0
      %v512 = vmax.f32 %v416, 0.0
      %v513 = vmax.f32 %v419, 0.0
      %v514 = vmax.f32 %v424, 0.0
      %v515 = vmax.f32 %v427, 0.0
      %v516 = vmax.f32 %v432, 0.0
      %v517 = vmax.f32 %v435, 0.0
      %v518 = vmax.f32 %v440, 0.0
      %v519 = vmax.f32 %v443, 0.0
      %v520 = vmax.f32 %v448, 0.0
      %v521 = vmax.f32 %v451, 0.0
      %v522 = vmax.f32 %v456, 0.0
      %v523 = vmax.f32 %v459, 0.0
      %v524 = vmax.f32 %v464, 0.0
      %v525 = vmax.f32 %v467, 0.0
      %v526 = vmax.f32 %v472, 0.0
      %v527 = vmax.f32 %v475, 0.0
      %v528 = vmax.f32 %v480, 0.0
      %v529 = vmax.f32 %v483, 0.0
      %v530 = vmax.f32 %v488, 0.0
      %v531 = vmax.f32 %v491, 0.0
      %v532 = vmax.f32 %v496, 0.0
      %v533 = vmax.f32 %v499, 0.0
      %v534 = vpack.c.bf16 %v503, %v502
      %v535 = vpack.c.bf16 %v505, %v504
      %v536 = vpack.c.bf16 %v507, %v506
      %v537 = vpack.c.bf16 %v509, %v508
      %v538 = vpack.c.bf16 %v511, %v510
      %v539 = vpack.c.bf16 %v513, %v512
      %v540 = vpack.c.bf16 %v515, %v514
      %v541 = vpack.c.bf16 %v517, %v516
      %v542 = vpack.c.bf16 %v519, %v518
      %v543 = vpack.c.bf16 %v521, %v520
      %v544 = vpack.c.bf16 %v523, %v522
      %v545 = vpack.c.bf16 %v525, %v524
      %v546 = vpack.c.bf16 %v527, %v526
      %v547 = vpack.c.bf16 %v529, %v528
      %v548 = vpack.c.bf16 %v531, %v530
      %v549 = vpack.c.bf16 %v533, %v532
      %v550 = vld [vmem:[%s3] sm:$0xf]
      %v551 = vld [vmem:[%s3 + $0x4] sm:$0xf]
      %v552 = vld [vmem:[%s3 + $0x8] sm:$0xf]
      %v553 = vld [vmem:[%s3 + $0xc] sm:$0xf]
      %v554 = vld [vmem:[%s3 + $0x10] sm:$0xf]
      %v555 = vld [vmem:[%s3 + $0x14] sm:$0xf]
      %v556 = vld [vmem:[%s3 + $0x18] sm:$0xf]
      %v557 = vld [vmem:[%s3 + $0x1c] sm:$0xf]
      %v558 = vld [vmem:[%s3 + $0x20] sm:$0xf]
      %v559 = vld [vmem:[%s3 + $0x24] sm:$0xf]
      %v560 = vld [vmem:[%s3 + $0x28] sm:$0xf]
      %v561 = vld [vmem:[%s3 + $0x2c] sm:$0xf]
      %v562 = vld [vmem:[%s3 + $0x30] sm:$0xf]
      %v563 = vld [vmem:[%s3 + $0x34] sm:$0xf]
      %v564 = vld [vmem:[%s3 + $0x38] sm:$0xf]
      %v565 = vld [vmem:[%s3 + $0x3c] sm:$0xf]
      %v566 = vld [vmem:[%s4] sm:$0x1]
      %v568 = vlaneseq
      %v569 = vshrl.u32 %v568, 7
      %v570 = vsub.s32 0, %v569
      %v571 = vrot.slane %v566, %v570
      %v589 = vunpack.c.l.b16 %v550
      %v590 = vunpack.c.l.b16 %v551
      %v591 = vunpack.c.l.b16 %v552
      %v592 = vunpack.c.l.b16 %v553
      %v593 = vunpack.c.l.b16 %v554
      %v594 = vunpack.c.l.b16 %v555
      %v595 = vunpack.c.l.b16 %v556
      %v596 = vunpack.c.l.b16 %v557
      %v597 = vunpack.c.l.b16 %v558
      %v598 = vunpack.c.l.b16 %v559
      %v599 = vunpack.c.l.b16 %v560
      %v600 = vunpack.c.l.b16 %v561
      %v601 = vunpack.c.l.b16 %v562
      %v602 = vunpack.c.l.b16 %v563
      %v603 = vunpack.c.l.b16 %v564
      %v604 = vunpack.c.l.b16 %v565
      %v605 = vpack.c.b16 %v590, %v589
      %v606 = vpack.c.b16 %v592, %v591
      %v607 = vpack.c.b16 %v594, %v593
      %v608 = vpack.c.b16 %v596, %v595
      %v609 = vpack.c.b16 %v598, %v597
      %v610 = vpack.c.b16 %v600, %v599
      %v611 = vpack.c.b16 %v602, %v601
      %v612 = vpack.c.b16 %v604, %v603
      %621 = vmatprep.subr.bf16.mxu0 0
      %622 = vmatpush1.bf16.msra.mxu0 %v605
      %623 = vmatprep.subr.bf16.mxu0 0
      %624 = vmatpush1.bf16.msra.mxu0 %v606
      %625 = vmatprep.subr.bf16.mxu0 0
      %626 = vmatpush1.bf16.msra.mxu0 %v607
      %627 = vmatprep.subr.bf16.mxu0 0
      %628 = vmatpush1.bf16.msra.mxu0 %v608
      %629 = vmatprep.subr.bf16.mxu0 0
      %630 = vmatpush1.bf16.msra.mxu0 %v609
      %631 = vmatprep.subr.bf16.mxu0 0
      %632 = vmatpush1.bf16.msra.mxu0 %v610
      %633 = vmatprep.subr.bf16.mxu0 0
      %634 = vmatpush1.bf16.msra.mxu0 %v611
      %635 = vmatprep.subr.bf16.mxu0 0
      %636 = vmatpush1.bf16.msra.mxu0 %v612
      %637 = vmatprep.subr.bf16.mxu0 0
      %638 = vmatpush1.bf16.msra.mxu0 0
      %639 = vmatprep.subr.bf16.mxu0 0
      %640 = vmatpush1.bf16.msra.mxu0 0
      %641 = vmatprep.subr.bf16.mxu0 0
      %642 = vmatpush1.bf16.msra.mxu0 0
      %643 = vmatprep.subr.bf16.mxu0 0
      %644 = vmatpush1.bf16.msra.mxu0 0
      %645 = vmatprep.subr.bf16.mxu0 0
      %646 = vmatpush1.bf16.msra.mxu0 0
      %647 = vmatprep.subr.bf16.mxu0 0
      %648 = vmatpush1.bf16.msra.mxu0 0
      %649 = vmatprep.subr.bf16.mxu0 0
      %650 = vmatpush1.bf16.msra.mxu0 0
      %651 = vmatprep.subr.bf16.mxu0 0
      %652 = vmatpush1.bf16.msra.mxu0 0
      %653 = vmatprep.mubr.bf16.mxu0 0
      %654 = vmatmul.mubr.bf16.gmra.mrb[0].mxu0 %v534
      %v655 = vpop.f32.mrb[0].mxu0
      %v656 = vadd.f32 %v571, %v655
      %v657 = vpop.f32.mrb[0].mxu0
      %v658 = vpop.f32.mrb[0].mxu0
      %v659 = vadd.f32 %v571, %v658
      %v660 = vpop.f32.mrb[0].mxu0
      %661 = vmatprep.mubr.bf16.mxu0 0
      %662 = vmatmul.mubr.bf16.gmra.mrb[0].mxu0 %v535
      %v663 = vpop.f32.mrb[0].mxu0
      %v664 = vadd.f32 %v571, %v663
      %v665 = vpop.f32.mrb[0].mxu0
      %v666 = vpop.f32.mrb[0].mxu0
      %v667 = vadd.f32 %v571, %v666
      %v668 = vpop.f32.mrb[0].mxu0
      %669 = vmatprep.mubr.bf16.mxu0 0
      %670 = vmatmul.mubr.bf16.gmra.mrb[0].mxu0 %v536
      %v671 = vpop.f32.mrb[0].mxu0
      %v672 = vadd.f32 %v571, %v671
      %v673 = vpop.f32.mrb[0].mxu0
      %v674 = vpop.f32.mrb[0].mxu0
      %v675 = vadd.f32 %v571, %v674
      %v676 = vpop.f32.mrb[0].mxu0
      %677 = vmatprep.mubr.bf16.mxu0 0
      %678 = vmatmul.mubr.bf16.gmra.mrb[0].mxu0 %v537
      %v679 = vpop.f32.mrb[0].mxu0
      %v680 = vadd.f32 %v571, %v679
      %v681 = vpop.f32.mrb[0].mxu0
      %v682 = vpop.f32.mrb[0].mxu0
      %v683 = vadd.f32 %v571, %v682
      %v684 = vpop.f32.mrb[0].mxu0
      %685 = vmatprep.mubr.bf16.mxu0 0
      %686 = vmatmul.mubr.bf16.gmra.mrb[0].mxu0 %v538
      %v687 = vpop.f32.mrb[0].mxu0
      %v688 = vadd.f32 %v571, %v687
      %v689 = vpop.f32.mrb[0].mxu0
      %v690 = vpop.f32.mrb[0].mxu0
      %v691 = vadd.f32 %v571, %v690
      %v692 = vpop.f32.mrb[0].mxu0
      %693 = vmatprep.mubr.bf16.mxu0 0
      %694 = vmatmul.mubr.bf16.gmra.mrb[0].mxu0 %v539
      %v695 = vpop.f32.mrb[0].mxu0
      %v696 = vadd.f32 %v571, %v695
      %v697 = vpop.f32.mrb[0].mxu0
      %v698 = vpop.f32.mrb[0].mxu0
      %v699 = vadd.f32 %v571, %v698
      %v700 = vpop.f32.mrb[0].mxu0
      %701 = vmatprep.mubr.bf16.mxu0 0
      %702 = vmatmul.mubr.bf16.gmra.mrb[0].mxu0 %v540
      %v703 = vpop.f32.mrb[0].mxu0
      %v704 = vadd.f32 %v571, %v703
      %v705 = vpop.f32.mrb[0].mxu0
      %v706 = vpop.f32.mrb[0].mxu0
      %v707 = vadd.f32 %v571, %v706
      %v708 = vpop.f32.mrb[0].mxu0
      %709 = vmatprep.mubr.bf16.mxu0 0
      %710 = vmatmul.mubr.bf16.gmra.mrb[0].mxu0 %v541
      %v711 = vpop.f32.mrb[0].mxu0
      %v712 = vadd.f32 %v571, %v711
      %v713 = vpop.f32.mrb[0].mxu0
      %v714 = vpop.f32.mrb[0].mxu0
      %v715 = vadd.f32 %v571, %v714
      %v716 = vpop.f32.mrb[0].mxu0
      %717 = vmatprep.mubr.bf16.mxu0 0
      %718 = vmatmul.mubr.bf16.gmra.mrb[0].mxu0 %v542
      %v719 = vpop.f32.mrb[0].mxu0
      %v720 = vadd.f32 %v571, %v719
      %v721 = vpop.f32.mrb[0].mxu0
      %v722 = vpop.f32.mrb[0].mxu0
      %v723 = vadd.f32 %v571, %v722
      %v724 = vpop.f32.mrb[0].mxu0
      %725 = vmatprep.mubr.bf16.mxu0 0
      %726 = vmatmul.mubr.bf16.gmra.mrb[0].mxu0 %v543
      %v727 = vpop.f32.mrb[0].mxu0
      %v728 = vadd.f32 %v571, %v727
      %v729 = vpop.f32.mrb[0].mxu0
      %v730 = vpop.f32.mrb[0].mxu0
      %v731 = vadd.f32 %v571, %v730
      %v732 = vpop.f32.mrb[0].mxu0
      %733 = vmatprep.mubr.bf16.mxu0 0
      %734 = vmatmul.mubr.bf16.gmra.mrb[0].mxu0 %v544
      %v735 = vpop.f32.mrb[0].mxu0
      %v736 = vadd.f32 %v571, %v735
      %v737 = vpop.f32.mrb[0].mxu0
      %v738 = vpop.f32.mrb[0].mxu0
      %v739 = vadd.f32 %v571, %v738
      %v740 = vpop.f32.mrb[0].mxu0
      %741 = vmatprep.mubr.bf16.mxu0 0
      %742 = vmatmul.mubr.bf16.gmra.mrb[0].mxu0 %v545
      %v743 = vpop.f32.mrb[0].mxu0
      %v744 = vadd.f32 %v571, %v743
      %v745 = vpop.f32.mrb[0].mxu0
      %v746 = vpop.f32.mrb[0].mxu0
      %v747 = vadd.f32 %v571, %v746
      %v748 = vpop.f32.mrb[0].mxu0
      %749 = vmatprep.mubr.bf16.mxu0 0
      %750 = vmatmul.mubr.bf16.gmra.mrb[0].mxu0 %v546
      %v751 = vpop.f32.mrb[0].mxu0
      %v752 = vadd.f32 %v571, %v751
      %v753 = vpop.f32.mrb[0].mxu0
      %v754 = vpop.f32.mrb[0].mxu0
      %v755 = vadd.f32 %v571, %v754
      %v756 = vpop.f32.mrb[0].mxu0
      %757 = vmatprep.mubr.bf16.mxu0 0
      %758 = vmatmul.mubr.bf16.gmra.mrb[0].mxu0 %v547
      %v759 = vpop.f32.mrb[0].mxu0
      %v760 = vadd.f32 %v571, %v759
      %v761 = vpop.f32.mrb[0].mxu0
      %v762 = vpop.f32.mrb[0].mxu0
      %v763 = vadd.f32 %v571, %v762
      %v764 = vpop.f32.mrb[0].mxu0
      %765 = vmatprep.mubr.bf16.mxu0 0
      %766 = vmatmul.mubr.bf16.gmra.mrb[0].mxu0 %v548
      %v767 = vpop.f32.mrb[0].mxu0
      %v768 = vadd.f32 %v571, %v767
      %v769 = vpop.f32.mrb[0].mxu0
      %v770 = vpop.f32.mrb[0].mxu0
      %v771 = vadd.f32 %v571, %v770
      %v772 = vpop.f32.mrb[0].mxu0
      %773 = vmatprep.mubr.bf16.mxu0 0
      %774 = vmatmul.mubr.bf16.gmra.mrb[0].mxu0 %v549
      %v775 = vpop.f32.mrb[0].mxu0
      %v776 = vadd.f32 %v571, %v775
      %v777 = vpop.f32.mrb[0].mxu0
      %v778 = vpop.f32.mrb[0].mxu0
      %v779 = vadd.f32 %v571, %v778
      %v780 = vpop.f32.mrb[0].mxu0
      %781 = vdwg.mxu0
      %782 = vmax.xlane.f32.xlu0 %v656
      %v783 = vpop.xlane.xlu0 %782
      %784 = vmax.xlane.f32.xlu0 %v659
      %v785 = vpop.xlane.xlu0 %784
      %786 = vmax.xlane.f32.xlu0 %v664
      %v787 = vpop.xlane.xlu0 %786
      %788 = vmax.xlane.f32.xlu0 %v667
      %v789 = vpop.xlane.xlu0 %788
      %790 = vmax.xlane.f32.xlu0 %v672
      %v791 = vpop.xlane.xlu0 %790
      %792 = vmax.xlane.f32.xlu0 %v675
      %v793 = vpop.xlane.xlu0 %792
      %794 = vmax.xlane.f32.xlu0 %v680
      %v795 = vpop.xlane.xlu0 %794
      %796 = vmax.xlane.f32.xlu0 %v683
      %v797 = vpop.xlane.xlu0 %796
      %798 = vmax.xlane.f32.xlu0 %v688
      %v799 = vpop.xlane.xlu0 %798
      %800 = vmax.xlane.f32.xlu0 %v691
      %v801 = vpop.xlane.xlu0 %800
      %802 = vmax.xlane.f32.xlu0 %v696
      %v803 = vpop.xlane.xlu0 %802
      %804 = vmax.xlane.f32.xlu0 %v699
      %v805 = vpop.xlane.xlu0 %804
      %806 = vmax.xlane.f32.xlu0 %v704
      %v807 = vpop.xlane.xlu0 %806
      %808 = vmax.xlane.f32.xlu0 %v707
      %v809 = vpop.xlane.xlu0 %808
      %810 = vmax.xlane.f32.xlu0 %v712
      %v811 = vpop.xlane.xlu0 %810
      %812 = vmax.xlane.f32.xlu0 %v715
      %v813 = vpop.xlane.xlu0 %812
      %814 = vmax.xlane.f32.xlu0 %v720
      %v815 = vpop.xlane.xlu0 %814
      %816 = vmax.xlane.f32.xlu0 %v723
      %v817 = vpop.xlane.xlu0 %816
      %818 = vmax.xlane.f32.xlu0 %v728
      %v819 = vpop.xlane.xlu0 %818
      %820 = vmax.xlane.f32.xlu0 %v731
      %v821 = vpop.xlane.xlu0 %820
      %822 = vmax.xlane.f32.xlu0 %v736
      %v823 = vpop.xlane.xlu0 %822
      %824 = vmax.xlane.f32.xlu0 %v739
      %v825 = vpop.xlane.xlu0 %824
      %826 = vmax.xlane.f32.xlu0 %v744
      %v827 = vpop.xlane.xlu0 %826
      %828 = vmax.xlane.f32.xlu0 %v747
      %v829 = vpop.xlane.xlu0 %828
      %830 = vmax.xlane.f32.xlu0 %v752
      %v831 = vpop.xlane.xlu0 %830
      %832 = vmax.xlane.f32.xlu0 %v755
      %v833 = vpop.xlane.xlu0 %832
      %834 = vmax.xlane.f32.xlu0 %v760
      %v835 = vpop.xlane.xlu0 %834
      %836 = vmax.xlane.f32.xlu0 %v763
      %v837 = vpop.xlane.xlu0 %836
      %838 = vmax.xlane.f32.xlu0 %v768
      %v839 = vpop.xlane.xlu0 %838
      %840 = vmax.xlane.f32.xlu0 %v771
      %v841 = vpop.xlane.xlu0 %840
      %842 = vmax.xlane.f32.xlu0 %v776
      %v843 = vpop.xlane.xlu0 %842
      %844 = vmax.xlane.f32.xlu0 %v779
      %v845 = vpop.xlane.xlu0 %844
      %v846 = vsub.f32 %v656, %v783
      %v847 = vsub.f32 %v659, %v785
      %v848 = vsub.f32 %v664, %v787
      %v849 = vsub.f32 %v667, %v789
      %v850 = vsub.f32 %v672, %v791
      %v851 = vsub.f32 %v675, %v793
      %v852 = vsub.f32 %v680, %v795
      %v853 = vsub.f32 %v683, %v797
      %v854 = vsub.f32 %v688, %v799
      %v855 = vsub.f32 %v691, %v801
      %v856 = vsub.f32 %v696, %v803
      %v857 = vsub.f32 %v699, %v805
      %v858 = vsub.f32 %v704, %v807
      %v859 = vsub.f32 %v707, %v809
      %v860 = vsub.f32 %v712, %v811
      %v861 = vsub.f32 %v715, %v813
      %v862 = vsub.f32 %v720, %v815
      %v863 = vsub.f32 %v723, %v817
      %v864 = vsub.f32 %v728, %v819
      %v865 = vsub.f32 %v731, %v821
      %v866 = vsub.f32 %v736, %v823
      %v867 = vsub.f32 %v739, %v825
      %v868 = vsub.f32 %v744, %v827
      %v869 = vsub.f32 %v747, %v829
      %v870 = vsub.f32 %v752, %v831
      %v871 = vsub.f32 %v755, %v833
      %v872 = vsub.f32 %v760, %v835
      %v873 = vsub.f32 %v763, %v837
      %v874 = vsub.f32 %v768, %v839
      %v875 = vsub.f32 %v771, %v841
      %v876 = vsub.f32 %v776, %v843
      %v877 = vsub.f32 %v779, %v845
      %v878 = vmul.f32 %v846, 1.442695
      %v879 = vpow.pop %v878
      %v880 = vmul.f32 %v847, 1.442695
      %v881 = vpow.pop %v880
      %v882 = vmul.f32 %v848, 1.442695
      %v883 = vpow.pop %v882
      %v884 = vmul.f32 %v849, 1.442695
      %v885 = vpow.pop %v884
      %v886 = vmul.f32 %v850, 1.442695
      %v887 = vpow.pop %v886
      %v888 = vmul.f32 %v851, 1.442695
      %v889 = vpow.pop %v888
      %v890 = vmul.f32 %v852, 1.442695
      %v891 = vpow.pop %v890
      %v892 = vmul.f32 %v853, 1.442695
      %v893 = vpow.pop %v892
      %v894 = vmul.f32 %v854, 1.442695
      %v895 = vpow.pop %v894
      %v896 = vmul.f32 %v855, 1.442695
      %v897 = vpow.pop %v896
      %v898 = vmul.f32 %v856, 1.442695
      %v899 = vpow.pop %v898
      %v900 = vmul.f32 %v857, 1.442695
      %v901 = vpow.pop %v900
      %v902 = vmul.f32 %v858, 1.442695
      %v903 = vpow.pop %v902
      %v904 = vmul.f32 %v859, 1.442695
      %v905 = vpow.pop %v904
      %v906 = vmul.f32 %v860, 1.442695
      %v907 = vpow.pop %v906
      %v908 = vmul.f32 %v861, 1.442695
      %v909 = vpow.pop %v908
      %v910 = vmul.f32 %v862, 1.442695
      %v911 = vpow.pop %v910
      %v912 = vmul.f32 %v863, 1.442695
      %v913 = vpow.pop %v912
      %v914 = vmul.f32 %v864, 1.442695
      %v915 = vpow.pop %v914
      %v916 = vmul.f32 %v865, 1.442695
      %v917 = vpow.pop %v916
      %v918 = vmul.f32 %v866, 1.442695
      %v919 = vpow.pop %v918
      %v920 = vmul.f32 %v867, 1.442695
      %v921 = vpow.pop %v920
      %v922 = vmul.f32 %v868, 1.442695
      %v923 = vpow.pop %v922
      %v924 = vmul.f32 %v869, 1.442695
      %v925 = vpow.pop %v924
      %v926 = vmul.f32 %v870, 1.442695
      %v927 = vpow.pop %v926
      %v928 = vmul.f32 %v871, 1.442695
      %v929 = vpow.pop %v928
      %v930 = vmul.f32 %v872, 1.442695
      %v931 = vpow.pop %v930
      %v932 = vmul.f32 %v873, 1.442695
      %v933 = vpow.pop %v932
      %v934 = vmul.f32 %v874, 1.442695
      %v935 = vpow.pop %v934
      %v936 = vmul.f32 %v875, 1.442695
      %v937 = vpow.pop %v936
      %v938 = vmul.f32 %v876, 1.442695
      %v939 = vpow.pop %v938
      %v940 = vmul.f32 %v877, 1.442695
      %v941 = vpow.pop %v940
      %942 = vadd.xlane.f32.xlu0 %v879
      %v943 = vpop.xlane.xlu0 %942
      %944 = vadd.xlane.f32.xlu0 %v881
      %v945 = vpop.xlane.xlu0 %944
      %946 = vadd.xlane.f32.xlu0 %v883
      %v947 = vpop.xlane.xlu0 %946
      %948 = vadd.xlane.f32.xlu0 %v885
      %v949 = vpop.xlane.xlu0 %948
      %950 = vadd.xlane.f32.xlu0 %v887
      %v951 = vpop.xlane.xlu0 %950
      %952 = vadd.xlane.f32.xlu0 %v889
      %v953 = vpop.xlane.xlu0 %952
      %954 = vadd.xlane.f32.xlu0 %v891
      %v955 = vpop.xlane.xlu0 %954
      %956 = vadd.xlane.f32.xlu0 %v893
      %v957 = vpop.xlane.xlu0 %956
      %958 = vadd.xlane.f32.xlu0 %v895
      %v959 = vpop.xlane.xlu0 %958
      %960 = vadd.xlane.f32.xlu0 %v897
      %v961 = vpop.xlane.xlu0 %960
      %962 = vadd.xlane.f32.xlu0 %v899
      %v963 = vpop.xlane.xlu0 %962
      %964 = vadd.xlane.f32.xlu0 %v901
      %v965 = vpop.xlane.xlu0 %964
      %966 = vadd.xlane.f32.xlu0 %v903
      %v967 = vpop.xlane.xlu0 %966
      %968 = vadd.xlane.f32.xlu0 %v905
      %v969 = vpop.xlane.xlu0 %968
      %970 = vadd.xlane.f32.xlu0 %v907
      %v971 = vpop.xlane.xlu0 %970
      %972 = vadd.xlane.f32.xlu0 %v909
      %v973 = vpop.xlane.xlu0 %972
      %974 = vadd.xlane.f32.xlu0 %v911
      %v975 = vpop.xlane.xlu0 %974
      %976 = vadd.xlane.f32.xlu0 %v913
      %v977 = vpop.xlane.xlu0 %976
      %978 = vadd.xlane.f32.xlu0 %v915
      %v979 = vpop.xlane.xlu0 %978
      %980 = vadd.xlane.f32.xlu0 %v917
      %v981 = vpop.xlane.xlu0 %980
      %982 = vadd.xlane.f32.xlu0 %v919
      %v983 = vpop.xlane.xlu0 %982
      %984 = vadd.xlane.f32.xlu0 %v921
      %v985 = vpop.xlane.xlu0 %984
      %986 = vadd.xlane.f32.xlu0 %v923
      %v987 = vpop.xlane.xlu0 %986
      %988 = vadd.xlane.f32.xlu0 %v925
      %v989 = vpop.xlane.xlu0 %988
      %990 = vadd.xlane.f32.xlu0 %v927
      %v991 = vpop.xlane.xlu0 %990
      %992 = vadd.xlane.f32.xlu0 %v929
      %v993 = vpop.xlane.xlu0 %992
      %994 = vadd.xlane.f32.xlu0 %v931
      %v995 = vpop.xlane.xlu0 %994
      %996 = vadd.xlane.f32.xlu0 %v933
      %v997 = vpop.xlane.xlu0 %996
      %998 = vadd.xlane.f32.xlu0 %v935
      %v999 = vpop.xlane.xlu0 %998
      %1000 = vadd.xlane.f32.xlu0 %v937
      %v1001 = vpop.xlane.xlu0 %1000
      %1002 = vadd.xlane.f32.xlu0 %v939
      %v1003 = vpop.xlane.xlu0 %1002
      %1004 = vadd.xlane.f32.xlu0 %v941
      %v1005 = vpop.xlane.xlu0 %1004
      %v1006 = vrcp.pop %v943
      %v1007 = vrcp.pop %v945
      %v1008 = vrcp.pop %v947
      %v1009 = vrcp.pop %v949
      %v1010 = vrcp.pop %v951
      %v1011 = vrcp.pop %v953
      %v1012 = vrcp.pop %v955
      %v1013 = vrcp.pop %v957
      %v1014 = vrcp.pop %v959
      %v1015 = vrcp.pop %v961
      %v1016 = vrcp.pop %v963
      %v1017 = vrcp.pop %v965
      %v1018 = vrcp.pop %v967
      %v1019 = vrcp.pop %v969
      %v1020 = vrcp.pop %v971
      %v1021 = vrcp.pop %v973
      %v1022 = vrcp.pop %v975
      %v1023 = vrcp.pop %v977
      %v1024 = vrcp.pop %v979
      %v1025 = vrcp.pop %v981
      %v1026 = vrcp.pop %v983
      %v1027 = vrcp.pop %v985
      %v1028 = vrcp.pop %v987
      %v1029 = vrcp.pop %v989
      %v1030 = vrcp.pop %v991
      %v1031 = vrcp.pop %v993
      %v1032 = vrcp.pop %v995
      %v1033 = vrcp.pop %v997
      %v1034 = vrcp.pop %v999
      %v1035 = vrcp.pop %v1001
      %v1036 = vrcp.pop %v1003
      %v1037 = vrcp.pop %v1005
      %v1038 = vmul.f32 %v879, %v1006
      %v1039 = vmul.f32 %v881, %v1007
      %v1040 = vmul.f32 %v883, %v1008
      %v1041 = vmul.f32 %v885, %v1009
      %v1042 = vmul.f32 %v887, %v1010
      %v1043 = vmul.f32 %v889, %v1011
      %v1044 = vmul.f32 %v891, %v1012
      %v1045 = vmul.f32 %v893, %v1013
      %v1046 = vmul.f32 %v895, %v1014
      %v1047 = vmul.f32 %v897, %v1015
      %v1048 = vmul.f32 %v899, %v1016
      %v1049 = vmul.f32 %v901, %v1017
      %v1050 = vmul.f32 %v903, %v1018
      %v1051 = vmul.f32 %v905, %v1019
      %v1052 = vmul.f32 %v907, %v1020
      %v1053 = vmul.f32 %v909, %v1021
      %v1054 = vmul.f32 %v911, %v1022
      %v1055 = vmul.f32 %v913, %v1023
      %v1056 = vmul.f32 %v915, %v1024
      %v1057 = vmul.f32 %v917, %v1025
      %v1058 = vmul.f32 %v919, %v1026
      %v1059 = vmul.f32 %v921, %v1027
      %v1060 = vmul.f32 %v923, %v1028
      %v1061 = vmul.f32 %v925, %v1029
      %v1062 = vmul.f32 %v927, %v1030
      %v1063 = vmul.f32 %v929, %v1031
      %v1064 = vmul.f32 %v931, %v1032
      %v1065 = vmul.f32 %v933, %v1033
      %v1066 = vmul.f32 %v935, %v1034
      %v1067 = vmul.f32 %v937, %v1035
      %v1068 = vmul.f32 %v939, %v1036
      %v1069 = vmul.f32 %v941, %v1037
      %vm1070 = vcmask 64512
      %1071 = vst.msk [vmem:[%s226] sm:$0xff] %vm1070, %v1038
      %1072 = vst.msk [vmem:[%s226 + $0x8] sm:$0xff] %vm1070, %v1039
      %1073 = vst.msk [vmem:[%s226 + $0x10] sm:$0xff] %vm1070, %v1040
      %1074 = vst.msk [vmem:[%s226 + $0x18] sm:$0xff] %vm1070, %v1041
      %1075 = vst.msk [vmem:[%s226 + $0x20] sm:$0xff] %vm1070, %v1042
      %1076 = vst.msk [vmem:[%s226 + $0x28] sm:$0xff] %vm1070, %v1043
      %1077 = vst.msk [vmem:[%s226 + $0x30] sm:$0xff] %vm1070, %v1044
      %1078 = vst.msk [vmem:[%s226 + $0x38] sm:$0xff] %vm1070, %v1045
      %1079 = vst.msk [vmem:[%s226 + $0x40] sm:$0xff] %vm1070, %v1046
      %1080 = vst.msk [vmem:[%s226 + $0x48] sm:$0xff] %vm1070, %v1047
      %1081 = vst.msk [vmem:[%s226 + $0x50] sm:$0xff] %vm1070, %v1048
      %1082 = vst.msk [vmem:[%s226 + $0x58] sm:$0xff] %vm1070, %v1049
      %1083 = vst.msk [vmem:[%s226 + $0x60] sm:$0xff] %vm1070, %v1050
      %1084 = vst.msk [vmem:[%s226 + $0x68] sm:$0xff] %vm1070, %v1051
      %1085 = vst.msk [vmem:[%s226 + $0x70] sm:$0xff] %vm1070, %v1052
      %1086 = vst.msk [vmem:[%s226 + $0x78] sm:$0xff] %vm1070, %v1053
      %1087 = vst.msk [vmem:[%s226 + $0x80] sm:$0xff] %vm1070, %v1054
      %1088 = vst.msk [vmem:[%s226 + $0x88] sm:$0xff] %vm1070, %v1055
      %1089 = vst.msk [vmem:[%s226 + $0x90] sm:$0xff] %vm1070, %v1056
      %1090 = vst.msk [vmem:[%s226 + $0x98] sm:$0xff] %vm1070, %v1057
      %1091 = vst.msk [vmem:[%s226 + $0xa0] sm:$0xff] %vm1070, %v1058
      %1092 = vst.msk [vmem:[%s226 + $0xa8] sm:$0xff] %vm1070, %v1059
      %1093 = vst.msk [vmem:[%s226 + $0xb0] sm:$0xff] %vm1070, %v1060
      %1094 = vst.msk [vmem:[%s226 + $0xb8] sm:$0xff] %vm1070, %v1061
      %1095 = vst.msk [vmem:[%s226 + $0xc0] sm:$0xff] %vm1070, %v1062
      %1096 = vst.msk [vmem:[%s226 + $0xc8] sm:$0xff] %vm1070, %v1063
      %1097 = vst.msk [vmem:[%s226 + $0xd0] sm:$0xff] %vm1070, %v1064
      %1098 = vst.msk [vmem:[%s226 + $0xd8] sm:$0xff] %vm1070, %v1065
      %1099 = vst.msk [vmem:[%s226 + $0xe0] sm:$0xff] %vm1070, %v1066
      %1100 = vst.msk [vmem:[%s226 + $0xe8] sm:$0xff] %vm1070, %v1067
      %1101 = vst.msk [vmem:[%s226 + $0xf0] sm:$0xff] %vm1070, %v1068
      %1102 = vst.msk [vmem:[%s226 + $0xf8] sm:$0xff] %vm1070, %v1069
      %s1103 = smul.u32 32, %s16
      %p1104 = scmp.lt.s32.totalorder %s1103, 63
      %s1105 = scalar_select %p1104, %s1103, 63
      %s1106 = smul.addr %s1105, 8
      %s1107 = scalar_lea.vmem %s5, %s1106
      // Predicated region
      $region41: #{tpu_custom_call.1} parent=39 // pred_check
        %p1108 = pneg %p144
      $region42: #{tpu_custom_call.1} parent=39 // pred_check_branch
        %1110 = sbr.rel (%p1108) target = $region44
      $region43: #{tpu_custom_call.1} parent=39 // pred_region
        %s1111 = smul.u32 32, %s16
      $region44: #{tpu_custom_call.1} parent=39 // pred_fallthru
        _
    $region40: #{tpu_custom_call.1} parent=5 // pred_fallthru
      _
    %p1112 = scmp.le.s32.totalorder 2, %s11
    // Predicated region
    $region45: #{tpu_custom_call.1} parent=5 // pred_check
      %p1113 = pneg %p1112
    $region46: #{tpu_custom_call.1} parent=5 // pred_check_branch
      %1115 = sbr.rel (%p1113) target = $region48
    $region47: #{tpu_custom_call.1} parent=5 // pred_region
      %s1116 = ssub.s32 %s11, 2
      // Predicated region
      $region49: #{tpu_custom_call.1} parent=47 // pred_check
        %p1117 = pneg %p150
      $region50: #{tpu_custom_call.1} parent=47 // pred_check_branch
        %1119 = sbr.rel (%p1117) target = $region52
      $region51: #{tpu_custom_call.1} parent=47 // pred_region
        %s1120 = smul.u32 32, %s17
        %p1121 = scmp.lt.s32.totalorder %s1120, 63
        %s1122 = scalar_select %p1121, %s1120, 63
        %s1123 = smul.addr %s1122, 8
        %s1124 = scalar_lea.vmem %s5, %s1123
      $region52: #{tpu_custom_call.1} parent=47 // pred_fallthru
        _
    $region48: #{tpu_custom_call.1} parent=5 // pred_fallthru
      _
  $region6: #{tpu_custom_call.1} parent=0 // loop_footer
    %s15 = sadd.s32 1, %s11
  $region7: #{tpu_custom_call.1} parent=0 // loop_footer_branch
    %10 = sbr.rel target = $region3
  $region8: #{tpu_custom_call.1} parent=0 // loop_exit
    _

</llo_original>
